<compile_context>
chip_gen: v6e
topology: v6e:2x2x1
jax: 0.10.0
libtpu: 0.0.40
codegen_flags: <defaults>
</compile_context>

<pallas_src>
import jax
import jax.numpy as jnp
from jax import lax
from jax.experimental import pallas as pl
from jax.experimental.pallas import tpu as pltpu


# ---------------------------------------------------------------------------
# Kernels
# ---------------------------------------------------------------------------

def _contract(x_tile, w_tile):
    # x_tile: (tm, tk) f32, w_tile: (tn, tk) f32 in torch Linear layout
    # (out_features, in_features). Contract over the shared K dim -> (tm, tn).
    # The MXU handles the transposed-RHS contraction natively.
    return lax.dot_general(
        x_tile, w_tile,
        dimension_numbers=(((1,), (1,)), ((), ())),
        preferred_element_type=jnp.float32)


def _sigmoid(v):
    # exp and the approximate reciprocal both run on the otherwise-idle EUP
    # slot; avoids a true VALU divide. Costs ~1e-3 absolute accuracy at most.
    return pl.reciprocal(1.0 + jnp.exp(-v), approx=True)


def linear_sigmoid_fullk_kernel(x_ref, w_ref, b_ref, o_ref):
    """Whole-K tile: single matmul, bias + sigmoid fused, no accumulator."""
    v = _contract(x_ref[...], w_ref[...]) + b_ref[...]
    o_ref[...] = _sigmoid(v).astype(o_ref.dtype)


def linear_sigmoid_ktile_kernel(x_ref, w_ref, b_ref, o_ref, acc_ref):
    """Fallback for K too large for VMEM: accumulate over the K grid axis.

    NOTE: correctness relies on K being the LAST (fastest-varying) grid axis
    and on the output block index being independent of k.
    """
    k = pl.program_id(2)

    @pl.when(k == 0)
    def _():
        acc_ref[...] = jnp.zeros_like(acc_ref)

    acc_ref[...] += _contract(x_ref[...], w_ref[...])

    @pl.when(k == pl.num_programs(2) - 1)
    def _():
        o_ref[...] = _sigmoid(acc_ref[...] + b_ref[...]).astype(o_ref.dtype)


# ---------------------------------------------------------------------------
# Wrapper
# ---------------------------------------------------------------------------

def _pick_tile(dim, limit, granule):
    """Largest multiple of `granule` that divides `dim`, capped at `limit`.

    Falls back to the full dim (block == full array is always layout-legal).
    """
    if dim <= limit:
        return dim
    t = (limit // granule) * granule
    while t >= granule:
        if dim % t == 0:
            return t
        t -= granule
    return dim


def linear_sigmoid(x, w, b, *, vmem_budget_bytes=24 * 1024 * 1024):
    """sigmoid(x @ w.T + b), fused in a single Pallas kernel.

    x: (M, K) f32, w: (N, K) f32 (torch nn.Linear layout), b: (N,) f32.
    Everything stays f32 (matches the torch module); the weight is consumed in
    its native (N, K) layout so the wrapper does no transpose / cast HBM pass.
    """
    M, K = x.shape
    N, Kw = w.shape
    assert K == Kw and b.shape == (N,), "shape mismatch"

    itemsize = 4  # f32 everywhere

    tm = _pick_tile(M, 256, 8)      # tm>=256 keeps the 256-wide MXU fed; M caps it
    tn = _pick_tile(N, 512, 128)

    # Keep >=2 blocks on a parallel axis so the second TensorCore (v7x
    # megacore) has work even when one tile would cover the whole output.
    if M // tm == 1 and N // tn == 1 and tn % 256 == 0:
        tn //= 2

    # Prefer consuming all of K in one tile (no reduction axis, no accumulator
    # scratch). VMEM estimate: double-buffered x / w / bias / out blocks.
    fullk_bytes = 2 * itemsize * (tm * K + tn * K + tn + tm * tn)
    if fullk_bytes <= vmem_budget_bytes:
        tk = K
    else:
        budget = vmem_budget_bytes - 3 * itemsize * tm * tn   # out bufs + acc
        tk_limit = max(budget // (2 * itemsize * (tm + tn)), 128)
        tk = _pick_tile(K, tk_limit, 128)

    grid_m, grid_n = M // tm, N // tn
    b2 = b.reshape(1, N)

    flops = 2 * M * N * K
    # Accurate re-read accounting: x is read once per N tile, w once per M tile.
    bytes_accessed = (x.size * itemsize * grid_n
                      + w.size * itemsize * grid_m
                      + b2.size * itemsize * grid_m
                      + M * N * itemsize)
    cost = pl.CostEstimate(flops=flops, transcendentals=M * N,
                           bytes_accessed=bytes_accessed)

    if tk == K:
        return pl.pallas_call(
            linear_sigmoid_fullk_kernel,
            out_shape=jax.ShapeDtypeStruct((M, N), jnp.float32),
            grid=(grid_m, grid_n),
            in_specs=[
                pl.BlockSpec((tm, K), lambda i, j: (i, 0)),    # x row-block
                pl.BlockSpec((tn, K), lambda i, j: (j, 0)),    # w, torch layout
                pl.BlockSpec((1, tn), lambda i, j: (0, j)),    # bias
            ],
            out_specs=pl.BlockSpec((tm, tn), lambda i, j: (i, j)),
            compiler_params=pltpu.CompilerParams(
                dimension_semantics=("parallel", "parallel")),
            cost_estimate=cost,
        )(x, w, b2)

    grid_k = K // tk
    return pl.pallas_call(
        linear_sigmoid_ktile_kernel,
        out_shape=jax.ShapeDtypeStruct((M, N), jnp.float32),
        grid=(grid_m, grid_n, grid_k),
        in_specs=[
            pl.BlockSpec((tm, tk), lambda i, j, k: (i, k)),
            pl.BlockSpec((tn, tk), lambda i, j, k: (j, k)),
            pl.BlockSpec((1, tn), lambda i, j, k: (0, j)),
        ],
        out_specs=pl.BlockSpec((tm, tn), lambda i, j, k: (i, j)),
        scratch_shapes=[pltpu.VMEM((tm, tn), jnp.float32)],
        compiler_params=pltpu.CompilerParams(
            dimension_semantics=("parallel", "parallel", "arbitrary")),
        cost_estimate=cost,
    )(x, w, b2)


if __name__ == "__main__":
    # Module spec: nn.Linear(in_features=2048, out_features) + sigmoid on a
    # (batch, 2048) input. Small demo: batch=8, out_features=256.
    M, K, N = 8, 2048, 256
    key = jax.random.PRNGKey(0)
    kx, kw, kb = jax.random.split(key, 3)

    x = jax.random.normal(kx, (M, K), dtype=jnp.float32)
    # torch.nn.Linear(K, N): weight (N, K), bias (N,), U(-1/sqrt(K), 1/sqrt(K))
    bound = 1.0 / (K ** 0.5)
    w = jax.random.uniform(kw, (N, K), dtype=jnp.float32, minval=-bound, maxval=bound)
    b = jax.random.uniform(kb, (N,), dtype=jnp.float32, minval=-bound, maxval=bound)

    ref = jax.nn.sigmoid(x @ w.T + b)

    # Primary path: whole problem fits in VMEM -> full-K kernel, grid (1, 2).
    out = jax.block_until_ready(linear_sigmoid(x, w, b))
    assert out.shape == (M, N)
    # Tolerance covers the approx EUP reciprocal in the sigmoid epilogue.
    assert jnp.allclose(out, ref, atol=5e-3, rtol=5e-3), "mismatch (full-K path)"

    # Also exercise the K-tiled accumulator fallback by shrinking the budget.
    out2 = jax.block_until_ready(linear_sigmoid(x, w, b, vmem_budget_bytes=1 << 20))
    assert jnp.allclose(out2, ref, atol=5e-3, rtol=5e-3), "mismatch (K-tiled path)"

    print("KERNEL_OK")
</pallas_src>

<mosaic_0001>
module attributes {stable_mosaic.version = 11 : i64} {
  func.func @linear_sigmoid_fullk_kernel(%arg0: i32, %arg1: i32, %arg2: memref<8x2048xf32, #tpu.memory_space<vmem>>, %arg3: memref<128x2048xf32, #tpu.memory_space<vmem>>, %arg4: memref<1x128xf32, #tpu.memory_space<vmem>>, %arg5: memref<8x128xf32, #tpu.memory_space<vmem>>) attributes {dimension_semantics = [#tpu.dimension_semantics<parallel>, #tpu.dimension_semantics<parallel>], iteration_bounds = array<i64: 1, 2>, scalar_prefetch = 0 : i64, scratch_operands = 0 : i64, tpu.core_type = #tpu.core_type<tc>, window_params = [{transform_indices = @transform_0, window_bounds = array<i64: 8, 2048>}, {transform_indices = @transform_1, window_bounds = array<i64: 128, 2048>}, {transform_indices = @transform_2, window_bounds = array<i64: 1, 128>}, {transform_indices = @transform_3, window_bounds = array<i64: 8, 128>}]} {
    %c0 = arith.constant 0 : index
    %c0_0 = arith.constant 0 : index
    %0 = vector.load %arg2[%c0, %c0_0] : memref<8x2048xf32, #tpu.memory_space<vmem>>, vector<8x2048xf32>
    %c0_1 = arith.constant 0 : index
    %c0_2 = arith.constant 0 : index
    %1 = vector.load %arg3[%c0_1, %c0_2] : memref<128x2048xf32, #tpu.memory_space<vmem>>, vector<128x2048xf32>
    %cst = arith.constant dense<0.000000e+00> : vector<8x128xf32>
    %2 = tpu.matmul %0, %1, %cst {dimension_numbers = #tpu.dot_dimension_numbers<[1], [1], [0], [0], [0, 0, 1, 0], [], []>} : vector<8x2048xf32>, vector<128x2048xf32>, vector<8x128xf32> -> vector<8x128xf32>
    %c0_3 = arith.constant 0 : index
    %c0_4 = arith.constant 0 : index
    %3 = vector.load %arg4[%c0_3, %c0_4] : memref<1x128xf32, #tpu.memory_space<vmem>>, vector<1x128xf32>
    %4 = vector.broadcast %3 : vector<1x128xf32> to vector<8x128xf32>
    %5 = arith.addf %2, %4 : vector<8x128xf32>
    %cst_5 = arith.constant 0.000000e+00 : f32
    %6 = vector.broadcast %cst_5 : f32 to vector<8x128xf32>
    %7 = arith.subf %6, %5 : vector<8x128xf32>
    %8 = math.exp %7 : vector<8x128xf32>
    %cst_6 = arith.constant 1.000000e+00 : f32
    %9 = vector.broadcast %cst_6 : f32 to vector<8x128xf32>
    %10 = arith.addf %9, %8 : vector<8x128xf32>
    %11 = tpu.reciprocal %10 {approx = true} : vector<8x128xf32> -> vector<8x128xf32>
    %c0_7 = arith.constant 0 : index
    %c0_8 = arith.constant 0 : index
    %12 = vector.load %arg5[%c0_7, %c0_8] : memref<8x128xf32, #tpu.memory_space<vmem>>, vector<8x128xf32>
    tpu.vector_store %arg5[%c0_7, %c0_8], %11 {strides = array<i32>} : memref<8x128xf32, #tpu.memory_space<vmem>>, vector<8x128xf32>,
    return
  }
  func.func @transform_0(%arg0: i32, %arg1: i32) -> (i32, i32) {
    %c0_i32 = arith.constant 0 : i32
    %c0_i32_0 = arith.constant 0 : i32
    return %arg0, %c0_i32 : i32, i32
  }
  func.func @transform_1(%arg0: i32, %arg1: i32) -> (i32, i32) {
    %c0_i32 = arith.constant 0 : i32
    %c0_i32_0 = arith.constant 0 : i32
    return %arg1, %c0_i32 : i32, i32
  }
  func.func @transform_2(%arg0: i32, %arg1: i32) -> (i32, i32) {
    %c0_i32 = arith.constant 0 : i32
    %c0_i32_0 = arith.constant 0 : i32
    return %c0_i32, %arg1 : i32, i32
  }
  func.func @transform_3(%arg0: i32, %arg1: i32) -> (i32, i32) {
    %c0_i32 = arith.constant 0 : i32
    return %arg0, %arg1 : i32, i32
  }
}

</mosaic_0001>

<llo_original>
// kernel: tpu_custom_call.1
$region0: #{tpu_custom_call.1}
  #allocation0 [shape = 'u32[]', space=smem, size = 0x4, offset = 0x4, fixed_abs, tag = 'smem constant byte address 0x4 - core index']
  #allocation1 [shape = 'u32[144,128]{1,0:T(1,128)}', space=vmem, size = 0x12000, scoped, tag = 'internal scratch']
  %s0 = inlined_call_operand.hbm [shape: f32[8,2048], index: 0, kind: input, shape index: {}]
  %s1 = inlined_call_operand.hbm [shape: f32[256,2048], index: 1, kind: input, shape index: {}]
  %s2 = inlined_call_operand.hbm [shape: f32[1,256], index: 2, kind: input, shape index: {}]
  %s3 = inlined_call_operand.hbm [shape: f32[8,256], index: 3, kind: output, shape index: {}]
  %s4 = sld [smem:[#allocation0]]
  $region57: #{tpu_custom_call.1} parent=0
    _
  %s6 = ssub.s32 1, %s4
  %s7 = scalar_select 0, %s6, %s4
  $region1: #{tpu_custom_call.1} parent=0
    #allocation2 [shape = 'u8[65536]{0}', space=vmem, size = 0x10000, scoped, tag = 'input window, operand 0, single buffered']
    #allocation3 [shape = 's32[2]{0}', space=sflag, size = 0x8, scoped, tag = 'scoped memory for tpu_custom_call.1']
    #allocation4 [shape = 's32[2]{0}', space=sflag, size = 0x8, scoped, tag = 'scoped memory for tpu_custom_call.1']
    #allocation5 [shape = 'u8[2097152]{0}', space=vmem, size = 0x200000, scoped, tag = 'input window, operand 1']
    #allocation6 [shape = 's32[2]{0}', space=sflag, size = 0x8, scoped, tag = 'scoped memory for tpu_custom_call.1']
    #allocation7 [shape = 'u8[1024]{0}', space=vmem, size = 0x400, scoped, tag = 'input window, operand 2']
    #allocation8 [shape = 'u8[8192]{0}', space=vmem, size = 0x2000, scoped, tag = 'output window, operand 0']
    %8 = vsyncpa [#allocation3], 0
    %9 = vsyncpa [#allocation6], 0
    %s10 = scalar_lea.sflag [#allocation6], 1
    %11 = vsyncpa %s10, 0
    %12 = vsyncpa [#allocation4], 0
    %s13 = scalar_lea.sflag [#allocation4], 1
    %14 = vsyncpa %s13, 0
    loop: start=0, step=1, limit=4
    $region2: #{tpu_custom_call.1} parent=1 // loop_pre_header
      _
    $region3: #{tpu_custom_call.1} parent=1 // loop_header
      %s16 = sphi 0, %s20
      %p17 = scmp.ge.s32.totalorder %s16, 4
      %s23 = sphi 0, %s35
      %s24 = sphi 0, %s31
      %s25 = sphi 0, %s23
      %s26 = sphi 0, %s24
      %s27 = sphi 0, %s25
      %s28 = sphi 0, %s26
      %s38 = sphi 0, %s40
      %s41 = sphi 0, %s38
      %s42 = sphi 0, %s41
      %s58 = sphi 0, %s42
      %s64 = sphi 0, %s66
      %s67 = sphi 0, %s64
      %s68 = sphi 0, %s67
      %s84 = sphi 0, %s68
      %s90 = sphi 0, %s92
      %s93 = sphi 0, %s90
      %s94 = sphi 0, %s93
      %s110 = sphi 0, %s94
      %s118 = sphi 0, %s120
      %s121 = sphi 0, %s118
      %s122 = sphi 0, %s121
      %s138 = sphi 0, %s122
    $region4: #{tpu_custom_call.1} parent=1 // loop_header_branch
      %19 = sbr.rel (%p17) target = $region8
    $region5: #{tpu_custom_call.1} parent=1 // loop_body
      %s21 = ssub.s32 %s16, 1
      %s22 = ssub.s32 %s16, 2
      %s29 = sadd.s32 1, %s24
      %p30 = scmp.ge.s32.totalorder %s29, 2
      %s31 = scalar_select %p30, 0, %s29
      %s32 = sadd.s32 1, %s23
      %s33 = scalar_select %p30, %s32, %s23
      %p34 = scmp.ge.s32.totalorder %s33, 1
      %s35 = scalar_select %p34, 0, %s33
      %s36 = ssub.s32 %s23, %s35
      %p37 = scmp.eq.s32.totalorder %s36, 0
      %s39 = sadd.s32 %s38, 1
      %s40 = scalar_select %p37, %s38, %s39
      %p43 = pneg %p37
      %p44 = scmp.eq.s32.totalorder %s16, 1
      %p45 = por %p43, %p44
      %p46 = scmp.ne.s32.totalorder %s38, %s41
      %p47 = scmp.eq.s32.totalorder %s16, 0
      %p48 = por %p46, %p47
      %p49 = scmp.ne.s32.totalorder %s38, %s41
      %p50 = scmp.eq.s32.totalorder %s21, 1
      %p51 = por %p49, %p50
      %p52 = scmp.ne.s32.totalorder %s41, %s42
      %p53 = scmp.eq.s32.totalorder %s21, 0
      %p54 = por %p52, %p53
      %p55 = scmp.ne.s32.totalorder %s41, %s42
      %p56 = scmp.eq.s32.totalorder %s22, 1
      %p57 = por %p55, %p56
      %p59 = scmp.ne.s32.totalorder %s42, %s58
      %p60 = scmp.eq.s32.totalorder %s22, 0
      %p61 = por %p59, %p60
      %s62 = ssub.s32 %s24, %s31
      %p63 = scmp.eq.s32.totalorder %s62, 0
      %s65 = sadd.s32 %s64, 1
      %s66 = scalar_select %p63, %s64, %s65
      %p69 = pneg %p63
      %p70 = scmp.eq.s32.totalorder %s16, 1
      %p71 = por %p69, %p70
      %p72 = scmp.ne.s32.totalorder %s64, %s67
      %p73 = scmp.eq.s32.totalorder %s16, 0
      %p74 = por %p72, %p73
      %p75 = scmp.ne.s32.totalorder %s64, %s67
      %p76 = scmp.eq.s32.totalorder %s21, 1
      %p77 = por %p75, %p76
      %p78 = scmp.ne.s32.totalorder %s67, %s68
      %p79 = scmp.eq.s32.totalorder %s21, 0
      %p80 = por %p78, %p79
      %p81 = scmp.ne.s32.totalorder %s67, %s68
      %p82 = scmp.eq.s32.totalorder %s22, 1
      %p83 = por %p81, %p82
      %p85 = scmp.ne.s32.totalorder %s68, %s84
      %p86 = scmp.eq.s32.totalorder %s22, 0
      %p87 = por %p85, %p86
      %s88 = ssub.s32 %s24, %s31
      %p89 = scmp.eq.s32.totalorder %s88, 0
      %s91 = sadd.s32 %s90, 1
      %s92 = scalar_select %p89, %s90, %s91
      %p95 = pneg %p89
      %p96 = scmp.eq.s32.totalorder %s16, 1
      %p97 = por %p95, %p96
      %p98 = scmp.ne.s32.totalorder %s90, %s93
      %p99 = scmp.eq.s32.totalorder %s16, 0
      %p100 = por %p98, %p99
      %p101 = scmp.ne.s32.totalorder %s90, %s93
      %p102 = scmp.eq.s32.totalorder %s21, 1
      %p103 = por %p101, %p102
      %p104 = scmp.ne.s32.totalorder %s93, %s94
      %p105 = scmp.eq.s32.totalorder %s21, 0
      %p106 = por %p104, %p105
      %p107 = scmp.ne.s32.totalorder %s93, %s94
      %p108 = scmp.eq.s32.totalorder %s22, 1
      %p109 = por %p107, %p108
      %p111 = scmp.ne.s32.totalorder %s94, %s110
      %p112 = scmp.eq.s32.totalorder %s22, 0
      %p113 = por %p111, %p112
      %s114 = ssub.s32 %s23, %s35
      %s115 = ssub.s32 %s24, %s31
      %s116 = sor.u32 %s114, %s115
      %p117 = scmp.eq.s32.totalorder %s116, 0
      %s119 = sadd.s32 %s118, 1
      %s120 = scalar_select %p117, %s118, %s119
      %p123 = pneg %p117
      %p124 = scmp.eq.s32.totalorder %s16, 1
      %p125 = por %p123, %p124
      %p126 = scmp.ne.s32.totalorder %s118, %s121
      %p127 = scmp.eq.s32.totalorder %s16, 0
      %p128 = por %p126, %p127
      %p129 = scmp.ne.s32.totalorder %s118, %s121
      %p130 = scmp.eq.s32.totalorder %s21, 1
      %p131 = por %p129, %p130
      %p132 = scmp.ne.s32.totalorder %s121, %s122
      %p133 = scmp.eq.s32.totalorder %s21, 0
      %p134 = por %p132, %p133
      %p135 = scmp.ne.s32.totalorder %s121, %s122
      %p136 = scmp.eq.s32.totalorder %s22, 1
      %p137 = por %p135, %p136
      %p139 = scmp.ne.s32.totalorder %s122, %s138
      %p140 = scmp.eq.s32.totalorder %s22, 0
      %p141 = por %p139, %p140
      %p142 = scmp.le.s32.totalorder 1, %s16
      %p143 = scmp.lt.s32.totalorder %s16, 3
      %p144 = pnand %p142, %p143
      %p145 = pneg %p144
      // Predicated region
      $region9: #{tpu_custom_call.1} parent=5 // pred_check
        _
      $region10: #{tpu_custom_call.1} parent=5 // pred_check_branch
        %147 = sbr.rel (%p144) target = $region12
      $region11: #{tpu_custom_call.1} parent=5 // pred_region
        %s148 = ssub.s32 %s16, 1
        // Predicated region
        $region13: #{tpu_custom_call.1} parent=11 // pred_check
          %p149 = pneg %p54
        $region14: #{tpu_custom_call.1} parent=11 // pred_check_branch
          %151 = sbr.rel (%p149) target = $region16
        $region15: #{tpu_custom_call.1} parent=11 // pred_region
          %s153 = ssub.s32 2048, 2048
          %154 = vsyncadd [#allocation3], %s153
          %s155 = smul.addr %s25, 16
          %s156 = smul.addr %s155, 128
          %s157 = scalar_lea.hbm %s0, %s156
          %s159 = sshll.u32 [#allocation2], 4
          %s160 = int_to_ptr.vmem [resolvable:$true] %s159
          %162 = dma.hbm_to_vmem [thread:$0]  %s157, 2048, %s160, [#allocation3]
        $region16: #{tpu_custom_call.1} parent=11 // pred_fallthru
          _
      $region12: #{tpu_custom_call.1} parent=5 // pred_fallthru
        _
      %p163 = scmp.lt.s32.totalorder %s16, 2
      // Predicated region
      $region17: #{tpu_custom_call.1} parent=5 // pred_check
        %p164 = pneg %p163
      $region18: #{tpu_custom_call.1} parent=5 // pred_check_branch
        %166 = sbr.rel (%p164) target = $region20
      $region19: #{tpu_custom_call.1} parent=5 // pred_region
        // Predicated region
        $region21: #{tpu_custom_call.1} parent=19 // pred_check
          %p167 = pneg %p74
        $region22: #{tpu_custom_call.1} parent=19 // pred_check_branch
          %169 = sbr.rel (%p167) target = $region24
        $region23: #{tpu_custom_call.1} parent=19 // pred_region
          %s170 = sand.u32 %s16, 1
          %s171 = scalar_lea.sflag [#allocation6], %s170
          %s172 = sand.u32 %s64, 1
          %s173 = smul.addr %s172, 2048
          %s174 = scalar_lea.vmem [#allocation5], %s173
          %s175 = smul.u32 16, %s24
          %s177 = ssub.s32 32768, 32768
          %178 = vsyncadd %s171, %s177
          %s179 = smul.addr %s175, 16
          %s180 = smul.addr %s179, 128
          %s181 = scalar_lea.hbm %s1, %s180
          %s182 = sshll.u32 %s174, 4
          %s183 = int_to_ptr.vmem [resolvable:$true] %s182
          %188 = dma.hbm_to_vmem [thread:$0]  %s181, 32768, %s183, %s171, 2048, 2048, 128
        $region24: #{tpu_custom_call.1} parent=19 // pred_fallthru
          _
        // Predicated region
        $region25: #{tpu_custom_call.1} parent=19 // pred_check
          %p189 = pneg %p100
        $region26: #{tpu_custom_call.1} parent=19 // pred_check_branch
          %191 = sbr.rel (%p189) target = $region28
        $region27: #{tpu_custom_call.1} parent=19 // pred_region
          %s192 = sand.u32 %s16, 1
          %s193 = scalar_lea.sflag [#allocation6], %s192
          %s194 = sand.u32 %s90, 1
          %s195 = scalar_lea.vmem [#allocation7], %s194
          %s197 = ssub.s32 16, 16
          %198 = vsyncadd %s193, %s197
          %s199 = smul.addr %s24, 16
          %s200 = scalar_lea.hbm %s2, %s199
          %s202 = sshll.u32 %s195, 4
          %s203 = int_to_ptr.vmem [resolvable:$true] %s202
          %205 = dma.hbm_to_vmem [thread:$0]  %s200, 16, %s203, %s193
        $region28: #{tpu_custom_call.1} parent=19 // pred_fallthru
          _
      $region20: #{tpu_custom_call.1} parent=5 // pred_fallthru
        _
      %p206 = scmp.le.s32.totalorder 1, %s16
      %p207 = scmp.lt.s32.totalorder %s16, 3
      %p208 = pnand %p206, %p207
      %p209 = pneg %p208
      // Predicated region
      $region29: #{tpu_custom_call.1} parent=5 // pred_check
        _
      $region30: #{tpu_custom_call.1} parent=5 // pred_check_branch
        %211 = sbr.rel (%p208) target = $region32
      $region31: #{tpu_custom_call.1} parent=5 // pred_region
        %s212 = ssub.s32 %s16, 1
        // Predicated region
        $region33: #{tpu_custom_call.1} parent=31 // pred_check
          %p213 = pneg %p54
        $region34: #{tpu_custom_call.1} parent=31 // pred_check_branch
          %215 = sbr.rel (%p213) target = $region36
        $region35: #{tpu_custom_call.1} parent=31 // pred_region
          %216 = dma.done [#allocation3], 2048
        $region36: #{tpu_custom_call.1} parent=31 // pred_fallthru
          _
        %s217 = sand.u32 %s21, 1
        %s218 = scalar_lea.sflag [#allocation6], %s217
        %s219 = sand.u32 %s67, 1
        %s220 = smul.addr %s219, 2048
        %s221 = scalar_lea.vmem [#allocation5], %s220
        // Predicated region
        $region37: #{tpu_custom_call.1} parent=31 // pred_check
          %p222 = pneg %p80
        $region38: #{tpu_custom_call.1} parent=31 // pred_check_branch
          %224 = sbr.rel (%p222) target = $region40
        $region39: #{tpu_custom_call.1} parent=31 // pred_region
          %225 = dma.done %s218, 32768
        $region40: #{tpu_custom_call.1} parent=31 // pred_fallthru
          _
        %s226 = sand.u32 %s21, 1
        %s227 = scalar_lea.sflag [#allocation6], %s226
        %s228 = sand.u32 %s93, 1
        %s229 = scalar_lea.vmem [#allocation7], %s228
        // Predicated region
        $region41: #{tpu_custom_call.1} parent=31 // pred_check
          %p230 = pneg %p106
        $region42: #{tpu_custom_call.1} parent=31 // pred_check_branch
          %232 = sbr.rel (%p230) target = $region44
        $region43: #{tpu_custom_call.1} parent=31 // pred_region
          %233 = dma.done %s227, 16
        $region44: #{tpu_custom_call.1} parent=31 // pred_fallthru
          _
        %p234 = pneg %p54
        %p235 = pneg %p51
        %s236 = sand.u32 %s21, 1
        %s237 = scalar_lea.sflag [#allocation6], %s236
        %s238 = sand.u32 %s67, 1
        %s239 = smul.addr %s238, 2048
        %s240 = scalar_lea.vmem [#allocation5], %s239
        %p241 = pneg %p80
        %p242 = pneg %p77
        %s243 = sand.u32 %s21, 1
        %s244 = scalar_lea.sflag [#allocation6], %s243
        %s245 = sand.u32 %s93, 1
        %s246 = scalar_lea.vmem [#allocation7], %s245
        %p247 = pneg %p106
        %p248 = pneg %p103
        %p249 = pneg %p134
        %p250 = pneg %p131
        %s251 = sand.u32 %s121, 1
        %s252 = scalar_lea.sflag [#allocation4], %s251
        %s253 = sand.u32 %s121, 1
        %s254 = smul.addr %s253, 8
        %s255 = scalar_lea.vmem [#allocation8], %s254
        %s256 = smul.u32 16, %s26
        %v257 = vld [vmem:[#allocation2] sm:$0xff]
        %v258 = vld [vmem:[#allocation2 + $0x8] sm:$0xff]
        %v259 = vld [vmem:[#allocation2 + $0x10] sm:$0xff]
        %v260 = vld [vmem:[#allocation2 + $0x18] sm:$0xff]
        %v261 = vld [vmem:[#allocation2 + $0x20] sm:$0xff]
        %v262 = vld [vmem:[#allocation2 + $0x28] sm:$0xff]
        %v263 = vld [vmem:[#allocation2 + $0x30] sm:$0xff]
        %v264 = vld [vmem:[#allocation2 + $0x38] sm:$0xff]
        %v265 = vld [vmem:[#allocation2 + $0x40] sm:$0xff]
        %v266 = vld [vmem:[#allocation2 + $0x48] sm:$0xff]
        %v267 = vld [vmem:[#allocation2 + $0x50] sm:$0xff]
        %v268 = vld [vmem:[#allocation2 + $0x58] sm:$0xff]
        %v269 = vld [vmem:[#allocation2 + $0x60] sm:$0xff]
        %v270 = vld [vmem:[#allocation2 + $0x68] sm:$0xff]
        %v271 = vld [vmem:[#allocation2 + $0x70] sm:$0xff]
        %v272 = vld [vmem:[#allocation2 + $0x78] sm:$0xff]
        %v273 = vld [vmem:[%s221] sm:$0xff]
        %v274 = vld [vmem:[%s221 + $0x8] sm:$0xff]
        %v275 = vld [vmem:[%s221 + $0x10] sm:$0xff]
        %v276 = vld [vmem:[%s221 + $0x18] sm:$0xff]
        %v277 = vld [vmem:[%s221 + $0x20] sm:$0xff]
        %v278 = vld [vmem:[%s221 + $0x28] sm:$0xff]
        %v279 = vld [vmem:[%s221 + $0x30] sm:$0xff]
        %v280 = vld [vmem:[%s221 + $0x38] sm:$0xff]
        %v281 = vld [vmem:[%s221 + $0x40] sm:$0xff]
        %v282 = vld [vmem:[%s221 + $0x48] sm:$0xff]
        %v283 = vld [vmem:[%s221 + $0x50] sm:$0xff]
        %v284 = vld [vmem:[%s221 + $0x58] sm:$0xff]
        %v285 = vld [vmem:[%s221 + $0x60] sm:$0xff]
        %v286 = vld [vmem:[%s221 + $0x68] sm:$0xff]
        %v287 = vld [vmem:[%s221 + $0x70] sm:$0xff]
        %v288 = vld [vmem:[%s221 + $0x78] sm:$0xff]
        %v289 = vld [vmem:[%s221 + $0x80] sm:$0xff]
        %v290 = vld [vmem:[%s221 + $0x88] sm:$0xff]
        %v291 = vld [vmem:[%s221 + $0x90] sm:$0xff]
        %v292 = vld [vmem:[%s221 + $0x98] sm:$0xff]
        %v293 = vld [vmem:[%s221 + $0xa0] sm:$0xff]
        %v294 = vld [vmem:[%s221 + $0xa8] sm:$0xff]
        %v295 = vld [vmem:[%s221 + $0xb0] sm:$0xff]
        %v296 = vld [vmem:[%s221 + $0xb8] sm:$0xff]
        %v297 = vld [vmem:[%s221 + $0xc0] sm:$0xff]
        %v298 = vld [vmem:[%s221 + $0xc8] sm:$0xff]
        %v299 = vld [vmem:[%s221 + $0xd0] sm:$0xff]
        %v300 = vld [vmem:[%s221 + $0xd8] sm:$0xff]
        %v301 = vld [vmem:[%s221 + $0xe0] sm:$0xff]
        %v302 = vld [vmem:[%s221 + $0xe8] sm:$0xff]
        %v303 = vld [vmem:[%s221 + $0xf0] sm:$0xff]
        %v304 = vld [vmem:[%s221 + $0xf8] sm:$0xff]
        %v305 = vld [vmem:[%s221 + $0x100] sm:$0xff]
        %v306 = vld [vmem:[%s221 + $0x108] sm:$0xff]
        %v307 = vld [vmem:[%s221 + $0x110] sm:$0xff]
        %v308 = vld [vmem:[%s221 + $0x118] sm:$0xff]
        %v309 = vld [vmem:[%s221 + $0x120] sm:$0xff]
        %v310 = vld [vmem:[%s221 + $0x128] sm:$0xff]
        %v311 = vld [vmem:[%s221 + $0x130] sm:$0xff]
        %v312 = vld [vmem:[%s221 + $0x138] sm:$0xff]
        %v313 = vld [vmem:[%s221 + $0x140] sm:$0xff]
        %v314 = vld [vmem:[%s221 + $0x148] sm:$0xff]
        %v315 = vld [vmem:[%s221 + $0x150] sm:$0xff]
        %v316 = vld [vmem:[%s221 + $0x158] sm:$0xff]
        %v317 = vld [vmem:[%s221 + $0x160] sm:$0xff]
        %v318 = vld [vmem:[%s221 + $0x168] sm:$0xff]
        %v319 = vld [vmem:[%s221 + $0x170] sm:$0xff]
        %v320 = vld [vmem:[%s221 + $0x178] sm:$0xff]
        %v321 = vld [vmem:[%s221 + $0x180] sm:$0xff]
        %v322 = vld [vmem:[%s221 + $0x188] sm:$0xff]
        %v323 = vld [vmem:[%s221 + $0x190] sm:$0xff]
        %v324 = vld [vmem:[%s221 + $0x198] sm:$0xff]
        %v325 = vld [vmem:[%s221 + $0x1a0] sm:$0xff]
        %v326 = vld [vmem:[%s221 + $0x1a8] sm:$0xff]
        %v327 = vld [vmem:[%s221 + $0x1b0] sm:$0xff]
        %v328 = vld [vmem:[%s221 + $0x1b8] sm:$0xff]
        %v329 = vld [vmem:[%s221 + $0x1c0] sm:$0xff]
        %v330 = vld [vmem:[%s221 + $0x1c8] sm:$0xff]
        %v331 = vld [vmem:[%s221 + $0x1d0] sm:$0xff]
        %v332 = vld [vmem:[%s221 + $0x1d8] sm:$0xff]
        %v333 = vld [vmem:[%s221 + $0x1e0] sm:$0xff]
        %v334 = vld [vmem:[%s221 + $0x1e8] sm:$0xff]
        %v335 = vld [vmem:[%s221 + $0x1f0] sm:$0xff]
        %v336 = vld [vmem:[%s221 + $0x1f8] sm:$0xff]
        %v337 = vld [vmem:[%s221 + $0x200] sm:$0xff]
        %v338 = vld [vmem:[%s221 + $0x208] sm:$0xff]
        %v339 = vld [vmem:[%s221 + $0x210] sm:$0xff]
        %v340 = vld [vmem:[%s221 + $0x218] sm:$0xff]
        %v341 = vld [vmem:[%s221 + $0x220] sm:$0xff]
        %v342 = vld [vmem:[%s221 + $0x228] sm:$0xff]
        %v343 = vld [vmem:[%s221 + $0x230] sm:$0xff]
        %v344 = vld [vmem:[%s221 + $0x238] sm:$0xff]
        %v345 = vld [vmem:[%s221 + $0x240] sm:$0xff]
        %v346 = vld [vmem:[%s221 + $0x248] sm:$0xff]
        %v347 = vld [vmem:[%s221 + $0x250] sm:$0xff]
        %v348 = vld [vmem:[%s221 + $0x258] sm:$0xff]
        %v349 = vld [vmem:[%s221 + $0x260] sm:$0xff]
        %v350 = vld [vmem:[%s221 + $0x268] sm:$0xff]
        %v351 = vld [vmem:[%s221 + $0x270] sm:$0xff]
        %v352 = vld [vmem:[%s221 + $0x278] sm:$0xff]
        %v353 = vld [vmem:[%s221 + $0x280] sm:$0xff]
        %v354 = vld [vmem:[%s221 + $0x288] sm:$0xff]
        %v355 = vld [vmem:[%s221 + $0x290] sm:$0xff]
        %v356 = vld [vmem:[%s221 + $0x298] sm:$0xff]
        %v357 = vld [vmem:[%s221 + $0x2a0] sm:$0xff]
        %v358 = vld [vmem:[%s221 + $0x2a8] sm:$0xff]
        %v359 = vld [vmem:[%s221 + $0x2b0] sm:$0xff]
        %v360 = vld [vmem:[%s221 + $0x2b8] sm:$0xff]
        %v361 = vld [vmem:[%s221 + $0x2c0] sm:$0xff]
        %v362 = vld [vmem:[%s221 + $0x2c8] sm:$0xff]
        %v363 = vld [vmem:[%s221 + $0x2d0] sm:$0xff]
        %v364 = vld [vmem:[%s221 + $0x2d8] sm:$0xff]
        %v365 = vld [vmem:[%s221 + $0x2e0] sm:$0xff]
        %v366 = vld [vmem:[%s221 + $0x2e8] sm:$0xff]
        %v367 = vld [vmem:[%s221 + $0x2f0] sm:$0xff]
        %v368 = vld [vmem:[%s221 + $0x2f8] sm:$0xff]
        %v369 = vld [vmem:[%s221 + $0x300] sm:$0xff]
        %v370 = vld [vmem:[%s221 + $0x308] sm:$0xff]
        %v371 = vld [vmem:[%s221 + $0x310] sm:$0xff]
        %v372 = vld [vmem:[%s221 + $0x318] sm:$0xff]
        %v373 = vld [vmem:[%s221 + $0x320] sm:$0xff]
        %v374 = vld [vmem:[%s221 + $0x328] sm:$0xff]
        %v375 = vld [vmem:[%s221 + $0x330] sm:$0xff]
        %v376 = vld [vmem:[%s221 + $0x338] sm:$0xff]
        %v377 = vld [vmem:[%s221 + $0x340] sm:$0xff]
        %v378 = vld [vmem:[%s221 + $0x348] sm:$0xff]
        %v379 = vld [vmem:[%s221 + $0x350] sm:$0xff]
        %v380 = vld [vmem:[%s221 + $0x358] sm:$0xff]
        %v381 = vld [vmem:[%s221 + $0x360] sm:$0xff]
        %v382 = vld [vmem:[%s221 + $0x368] sm:$0xff]
        %v383 = vld [vmem:[%s221 + $0x370] sm:$0xff]
        %v384 = vld [vmem:[%s221 + $0x378] sm:$0xff]
        %v385 = vld [vmem:[%s221 + $0x380] sm:$0xff]
        %v386 = vld [vmem:[%s221 + $0x388] sm:$0xff]
        %v387 = vld [vmem:[%s221 + $0x390] sm:$0xff]
        %v388 = vld [vmem:[%s221 + $0x398] sm:$0xff]
        %v389 = vld [vmem:[%s221 + $0x3a0] sm:$0xff]
        %v390 = vld [vmem:[%s221 + $0x3a8] sm:$0xff]
        %v391 = vld [vmem:[%s221 + $0x3b0] sm:$0xff]
        %v392 = vld [vmem:[%s221 + $0x3b8] sm:$0xff]
        %v393 = vld [vmem:[%s221 + $0x3c0] sm:$0xff]
        %v394 = vld [vmem:[%s221 + $0x3c8] sm:$0xff]
        %v395 = vld [vmem:[%s221 + $0x3d0] sm:$0xff]
        %v396 = vld [vmem:[%s221 + $0x3d8] sm:$0xff]
        %v397 = vld [vmem:[%s221 + $0x3e0] sm:$0xff]
        %v398 = vld [vmem:[%s221 + $0x3e8] sm:$0xff]
        %v399 = vld [vmem:[%s221 + $0x3f0] sm:$0xff]
        %v400 = vld [vmem:[%s221 + $0x3f8] sm:$0xff]
        %v401 = vld [vmem:[%s221 + $0x400] sm:$0xff]
        %v402 = vld [vmem:[%s221 + $0x408] sm:$0xff]
        %v403 = vld [vmem:[%s221 + $0x410] sm:$0xff]
        %v404 = vld [vmem:[%s221 + $0x418] sm:$0xff]
        %v405 = vld [vmem:[%s221 + $0x420] sm:$0xff]
        %v406 = vld [vmem:[%s221 + $0x428] sm:$0xff]
        %v407 = vld [vmem:[%s221 + $0x430] sm:$0xff]
        %v408 = vld [vmem:[%s221 + $0x438] sm:$0xff]
        %v409 = vld [vmem:[%s221 + $0x440] sm:$0xff]
        %v410 = vld [vmem:[%s221 + $0x448] sm:$0xff]
        %v411 = vld [vmem:[%s221 + $0x450] sm:$0xff]
        %v412 = vld [vmem:[%s221 + $0x458] sm:$0xff]
        %v413 = vld [vmem:[%s221 + $0x460] sm:$0xff]
        %v414 = vld [vmem:[%s221 + $0x468] sm:$0xff]
        %v415 = vld [vmem:[%s221 + $0x470] sm:$0xff]
        %v416 = vld [vmem:[%s221 + $0x478] sm:$0xff]
        %v417 = vld [vmem:[%s221 + $0x480] sm:$0xff]
        %v418 = vld [vmem:[%s221 + $0x488] sm:$0xff]
        %v419 = vld [vmem:[%s221 + $0x490] sm:$0xff]
        %v420 = vld [vmem:[%s221 + $0x498] sm:$0xff]
        %v421 = vld [vmem:[%s221 + $0x4a0] sm:$0xff]
        %v422 = vld [vmem:[%s221 + $0x4a8] sm:$0xff]
        %v423 = vld [vmem:[%s221 + $0x4b0] sm:$0xff]
        %v424 = vld [vmem:[%s221 + $0x4b8] sm:$0xff]
        %v425 = vld [vmem:[%s221 + $0x4c0] sm:$0xff]
        %v426 = vld [vmem:[%s221 + $0x4c8] sm:$0xff]
        %v427 = vld [vmem:[%s221 + $0x4d0] sm:$0xff]
        %v428 = vld [vmem:[%s221 + $0x4d8] sm:$0xff]
        %v429 = vld [vmem:[%s221 + $0x4e0] sm:$0xff]
        %v430 = vld [vmem:[%s221 + $0x4e8] sm:$0xff]
        %v431 = vld [vmem:[%s221 + $0x4f0] sm:$0xff]
        %v432 = vld [vmem:[%s221 + $0x4f8] sm:$0xff]
        %v433 = vld [vmem:[%s221 + $0x500] sm:$0xff]
        %v434 = vld [vmem:[%s221 + $0x508] sm:$0xff]
        %v435 = vld [vmem:[%s221 + $0x510] sm:$0xff]
        %v436 = vld [vmem:[%s221 + $0x518] sm:$0xff]
        %v437 = vld [vmem:[%s221 + $0x520] sm:$0xff]
        %v438 = vld [vmem:[%s221 + $0x528] sm:$0xff]
        %v439 = vld [vmem:[%s221 + $0x530] sm:$0xff]
        %v440 = vld [vmem:[%s221 + $0x538] sm:$0xff]
        %v441 = vld [vmem:[%s221 + $0x540] sm:$0xff]
        %v442 = vld [vmem:[%s221 + $0x548] sm:$0xff]
        %v443 = vld [vmem:[%s221 + $0x550] sm:$0xff]
        %v444 = vld [vmem:[%s221 + $0x558] sm:$0xff]
        %v445 = vld [vmem:[%s221 + $0x560] sm:$0xff]
        %v446 = vld [vmem:[%s221 + $0x568] sm:$0xff]
        %v447 = vld [vmem:[%s221 + $0x570] sm:$0xff]
        %v448 = vld [vmem:[%s221 + $0x578] sm:$0xff]
        %v449 = vld [vmem:[%s221 + $0x580] sm:$0xff]
        %v450 = vld [vmem:[%s221 + $0x588] sm:$0xff]
        %v451 = vld [vmem:[%s221 + $0x590] sm:$0xff]
        %v452 = vld [vmem:[%s221 + $0x598] sm:$0xff]
        %v453 = vld [vmem:[%s221 + $0x5a0] sm:$0xff]
        %v454 = vld [vmem:[%s221 + $0x5a8] sm:$0xff]
        %v455 = vld [vmem:[%s221 + $0x5b0] sm:$0xff]
        %v456 = vld [vmem:[%s221 + $0x5b8] sm:$0xff]
        %v457 = vld [vmem:[%s221 + $0x5c0] sm:$0xff]
        %v458 = vld [vmem:[%s221 + $0x5c8] sm:$0xff]
        %v459 = vld [vmem:[%s221 + $0x5d0] sm:$0xff]
        %v460 = vld [vmem:[%s221 + $0x5d8] sm:$0xff]
        %v461 = vld [vmem:[%s221 + $0x5e0] sm:$0xff]
        %v462 = vld [vmem:[%s221 + $0x5e8] sm:$0xff]
        %v463 = vld [vmem:[%s221 + $0x5f0] sm:$0xff]
        %v464 = vld [vmem:[%s221 + $0x5f8] sm:$0xff]
        %v465 = vld [vmem:[%s221 + $0x600] sm:$0xff]
        %v466 = vld [vmem:[%s221 + $0x608] sm:$0xff]
        %v467 = vld [vmem:[%s221 + $0x610] sm:$0xff]
        %v468 = vld [vmem:[%s221 + $0x618] sm:$0xff]
        %v469 = vld [vmem:[%s221 + $0x620] sm:$0xff]
        %v470 = vld [vmem:[%s221 + $0x628] sm:$0xff]
        %v471 = vld [vmem:[%s221 + $0x630] sm:$0xff]
        %v472 = vld [vmem:[%s221 + $0x638] sm:$0xff]
        %v473 = vld [vmem:[%s221 + $0x640] sm:$0xff]
        %v474 = vld [vmem:[%s221 + $0x648] sm:$0xff]
        %v475 = vld [vmem:[%s221 + $0x650] sm:$0xff]
        %v476 = vld [vmem:[%s221 + $0x658] sm:$0xff]
        %v477 = vld [vmem:[%s221 + $0x660] sm:$0xff]
        %v478 = vld [vmem:[%s221 + $0x668] sm:$0xff]
        %v479 = vld [vmem:[%s221 + $0x670] sm:$0xff]
        %v480 = vld [vmem:[%s221 + $0x678] sm:$0xff]
        %v481 = vld [vmem:[%s221 + $0x680] sm:$0xff]
        %v482 = vld [vmem:[%s221 + $0x688] sm:$0xff]
        %v483 = vld [vmem:[%s221 + $0x690] sm:$0xff]
        %v484 = vld [vmem:[%s221 + $0x698] sm:$0xff]
        %v485 = vld [vmem:[%s221 + $0x6a0] sm:$0xff]
        %v486 = vld [vmem:[%s221 + $0x6a8] sm:$0xff]
        %v487 = vld [vmem:[%s221 + $0x6b0] sm:$0xff]
        %v488 = vld [vmem:[%s221 + $0x6b8] sm:$0xff]
        %v489 = vld [vmem:[%s221 + $0x6c0] sm:$0xff]
        %v490 = vld [vmem:[%s221 + $0x6c8] sm:$0xff]
        %v491 = vld [vmem:[%s221 + $0x6d0] sm:$0xff]
        %v492 = vld [vmem:[%s221 + $0x6d8] sm:$0xff]
        %v493 = vld [vmem:[%s221 + $0x6e0] sm:$0xff]
        %v494 = vld [vmem:[%s221 + $0x6e8] sm:$0xff]
        %v495 = vld [vmem:[%s221 + $0x6f0] sm:$0xff]
        %v496 = vld [vmem:[%s221 + $0x6f8] sm:$0xff]
        %v497 = vld [vmem:[%s221 + $0x700] sm:$0xff]
        %v498 = vld [vmem:[%s221 + $0x708] sm:$0xff]
        %v499 = vld [vmem:[%s221 + $0x710] sm:$0xff]
        %v500 = vld [vmem:[%s221 + $0x718] sm:$0xff]
        %v501 = vld [vmem:[%s221 + $0x720] sm:$0xff]
        %v502 = vld [vmem:[%s221 + $0x728] sm:$0xff]
        %v503 = vld [vmem:[%s221 + $0x730] sm:$0xff]
        %v504 = vld [vmem:[%s221 + $0x738] sm:$0xff]
        %v505 = vld [vmem:[%s221 + $0x740] sm:$0xff]
        %v506 = vld [vmem:[%s221 + $0x748] sm:$0xff]
        %v507 = vld [vmem:[%s221 + $0x750] sm:$0xff]
        %v508 = vld [vmem:[%s221 + $0x758] sm:$0xff]
        %v509 = vld [vmem:[%s221 + $0x760] sm:$0xff]
        %v510 = vld [vmem:[%s221 + $0x768] sm:$0xff]
        %v511 = vld [vmem:[%s221 + $0x770] sm:$0xff]
        %v512 = vld [vmem:[%s221 + $0x778] sm:$0xff]
        %v513 = vld [vmem:[%s221 + $0x780] sm:$0xff]
        %v514 = vld [vmem:[%s221 + $0x788] sm:$0xff]
        %v515 = vld [vmem:[%s221 + $0x790] sm:$0xff]
        %v516 = vld [vmem:[%s221 + $0x798] sm:$0xff]
        %v517 = vld [vmem:[%s221 + $0x7a0] sm:$0xff]
        %v518 = vld [vmem:[%s221 + $0x7a8] sm:$0xff]
        %v519 = vld [vmem:[%s221 + $0x7b0] sm:$0xff]
        %v520 = vld [vmem:[%s221 + $0x7b8] sm:$0xff]
        %v521 = vld [vmem:[%s221 + $0x7c0] sm:$0xff]
        %v522 = vld [vmem:[%s221 + $0x7c8] sm:$0xff]
        %v523 = vld [vmem:[%s221 + $0x7d0] sm:$0xff]
        %v524 = vld [vmem:[%s221 + $0x7d8] sm:$0xff]
        %v525 = vld [vmem:[%s221 + $0x7e0] sm:$0xff]
        %v526 = vld [vmem:[%s221 + $0x7e8] sm:$0xff]
        %v527 = vld [vmem:[%s221 + $0x7f0] sm:$0xff]
        %v528 = vld [vmem:[%s221 + $0x7f8] sm:$0xff]
        %v529 = vld [vmem:[%s229] sm:$0x1]
        %v531 = vlaneseq
        %v532 = vshrl.u32 %v531, 7
        %v533 = vsub.s32 0, %v532
        %v534 = vrot.slane %v529, %v533
        %536 = vmatprep.subr.mxu0 %v514
        %537 = vmatpush1.xpose.msra.mxu0 %v513
        %538 = vmatprep.subr.mxu0 %v498
        %539 = vmatpush1.xpose.msra.mxu0 %v497
        %540 = vmatprep.subr.mxu0 %v482
        %541 = vmatpush1.xpose.msra.mxu0 %v481
        %542 = vmatprep.subr.mxu0 %v466
        %543 = vmatpush1.xpose.msra.mxu0 %v465
        %544 = vmatprep.subr.mxu0 %v450
        %545 = vmatpush1.xpose.msra.mxu0 %v449
        %546 = vmatprep.subr.mxu0 %v434
        %547 = vmatpush1.xpose.msra.mxu0 %v433
        %548 = vmatprep.subr.mxu0 %v418
        %549 = vmatpush1.xpose.msra.mxu0 %v417
        %550 = vmatprep.subr.mxu0 %v402
        %551 = vmatpush1.xpose.msra.mxu0 %v401
        %552 = vmatprep.subr.mxu0 %v386
        %553 = vmatpush1.xpose.msra.mxu0 %v385
        %554 = vmatprep.subr.mxu0 %v370
        %555 = vmatpush1.xpose.msra.mxu0 %v369
        %556 = vmatprep.subr.mxu0 %v354
        %557 = vmatpush1.xpose.msra.mxu0 %v353
        %558 = vmatprep.subr.mxu0 %v338
        %559 = vmatpush1.xpose.msra.mxu0 %v337
        %560 = vmatprep.subr.mxu0 %v322
        %561 = vmatpush1.xpose.msra.mxu0 %v321
        %562 = vmatprep.subr.mxu0 %v306
        %563 = vmatpush1.xpose.msra.mxu0 %v305
        %564 = vmatprep.subr.mxu0 %v290
        %565 = vmatpush1.xpose.msra.mxu0 %v289
        %566 = vmatprep.subr.mxu0 %v274
        %567 = vmatpush1.xpose.msra.mxu0 %v273
        %568 = vmatprep.subr.mxu0 0.0
        %569 = vmatpush2.xpose.msra.mxu0 0.0
        %570 = vmatprep.subr.mxu0 0.0
        %571 = vmatpush2.xpose.msra.mxu0 0.0
        %572 = vmatprep.subr.mxu0 0.0
        %573 = vmatpush2.xpose.msra.mxu0 0.0
        %574 = vmatprep.subr.mxu0 0.0
        %575 = vmatpush2.xpose.msra.mxu0 0.0
        %576 = vmatprep.subr.mxu0 0.0
        %577 = vmatpush2.xpose.msra.mxu0 0.0
        %578 = vmatprep.subr.mxu0 0.0
        %579 = vmatpush2.xpose.msra.mxu0 0.0
        %580 = vmatprep.subr.mxu0 0.0
        %581 = vmatpush2.xpose.msra.mxu0 0.0
        %582 = vmatprep.subr.mxu0 0.0
        %583 = vmatpush2.xpose.msra.mxu0 0.0
        %584 = vmatprep.subr.mxu0 0.0
        %585 = vmatpush2.xpose.msra.mxu0 0.0
        %586 = vmatprep.subr.mxu0 0.0
        %587 = vmatpush2.xpose.msra.mxu0 0.0
        %588 = vmatprep.subr.mxu0 0.0
        %589 = vmatpush2.xpose.msra.mxu0 0.0
        %590 = vmatprep.subr.mxu0 0.0
        %591 = vmatpush2.xpose.msra.mxu0 0.0
        %592 = vmatprep.subr.mxu0 0.0
        %593 = vmatpush2.xpose.msra.mxu0 0.0
        %594 = vmatprep.subr.mxu0 0.0
        %595 = vmatpush2.xpose.msra.mxu0 0.0
        %596 = vmatprep.subr.mxu0 0.0
        %597 = vmatpush2.xpose.msra.mxu0 0.0
        %598 = vmatprep.subr.mxu0 0.0
        %599 = vmatpush2.xpose.msra.mxu0 0.0
        %600 = vmatprep.mubr.f32.mxu0 %v258
        %601 = vmatmul.mubr.f32.gmra.mxu0 %v257
        %v602 = vpop.f32.mrf.mxu0
        %v603 = vadd.f32 %v534, %v602
        %v604 = vpop.f32.mrf.mxu0
        %605 = vdwg.mxu0
        %606 = vmatprep.subr.mxu0 %v516
        %607 = vmatpush1.xpose.msra.mxu0 %v515
        %608 = vmatprep.subr.mxu0 %v500
        %609 = vmatpush1.xpose.msra.mxu0 %v499
        %610 = vmatprep.subr.mxu0 %v484
        %611 = vmatpush1.xpose.msra.mxu0 %v483
        %612 = vmatprep.subr.mxu0 %v468
        %613 = vmatpush1.xpose.msra.mxu0 %v467
        %614 = vmatprep.subr.mxu0 %v452
        %615 = vmatpush1.xpose.msra.mxu0 %v451
        %616 = vmatprep.subr.mxu0 %v436
        %617 = vmatpush1.xpose.msra.mxu0 %v435
        %618 = vmatprep.subr.mxu0 %v420
        %619 = vmatpush1.xpose.msra.mxu0 %v419
        %620 = vmatprep.subr.mxu0 %v404
        %621 = vmatpush1.xpose.msra.mxu0 %v403
        %622 = vmatprep.subr.mxu0 %v388
        %623 = vmatpush1.xpose.msra.mxu0 %v387
        %624 = vmatprep.subr.mxu0 %v372
        %625 = vmatpush1.xpose.msra.mxu0 %v371
        %626 = vmatprep.subr.mxu0 %v356
        %627 = vmatpush1.xpose.msra.mxu0 %v355
        %628 = vmatprep.subr.mxu0 %v340
        %629 = vmatpush1.xpose.msra.mxu0 %v339
        %630 = vmatprep.subr.mxu0 %v324
        %631 = vmatpush1.xpose.msra.mxu0 %v323
        %632 = vmatprep.subr.mxu0 %v308
        %633 = vmatpush1.xpose.msra.mxu0 %v307
        %634 = vmatprep.subr.mxu0 %v292
        %635 = vmatpush1.xpose.msra.mxu0 %v291
        %636 = vmatprep.subr.mxu0 %v276
        %637 = vmatpush1.xpose.msra.mxu0 %v275
        %638 = vmatprep.subr.mxu0 0.0
        %639 = vmatpush2.xpose.msra.mxu0 0.0
        %640 = vmatprep.subr.mxu0 0.0
        %641 = vmatpush2.xpose.msra.mxu0 0.0
        %642 = vmatprep.subr.mxu0 0.0
        %643 = vmatpush2.xpose.msra.mxu0 0.0
        %644 = vmatprep.subr.mxu0 0.0
        %645 = vmatpush2.xpose.msra.mxu0 0.0
        %646 = vmatprep.subr.mxu0 0.0
        %647 = vmatpush2.xpose.msra.mxu0 0.0
        %648 = vmatprep.subr.mxu0 0.0
        %649 = vmatpush2.xpose.msra.mxu0 0.0
        %650 = vmatprep.subr.mxu0 0.0
        %651 = vmatpush2.xpose.msra.mxu0 0.0
        %652 = vmatprep.subr.mxu0 0.0
        %653 = vmatpush2.xpose.msra.mxu0 0.0
        %654 = vmatprep.subr.mxu0 0.0
        %655 = vmatpush2.xpose.msra.mxu0 0.0
        %656 = vmatprep.subr.mxu0 0.0
        %657 = vmatpush2.xpose.msra.mxu0 0.0
        %658 = vmatprep.subr.mxu0 0.0
        %659 = vmatpush2.xpose.msra.mxu0 0.0
        %660 = vmatprep.subr.mxu0 0.0
        %661 = vmatpush2.xpose.msra.mxu0 0.0
        %662 = vmatprep.subr.mxu0 0.0
        %663 = vmatpush2.xpose.msra.mxu0 0.0
        %664 = vmatprep.subr.mxu0 0.0
        %665 = vmatpush2.xpose.msra.mxu0 0.0
        %666 = vmatprep.subr.mxu0 0.0
        %667 = vmatpush2.xpose.msra.mxu0 0.0
        %668 = vmatprep.subr.mxu0 0.0
        %669 = vmatpush2.xpose.msra.mxu0 0.0
        %670 = vmatprep.mubr.f32.mxu0 %v260
        %671 = vmatmul.mubr.f32.gmra.mxu0 %v259
        %v672 = vpop.f32.mrf.mxu0
        %v673 = vadd.f32 %v603, %v672
        %v674 = vpop.f32.mrf.mxu0
        %675 = vdwg.mxu0
        %676 = vmatprep.subr.mxu0 %v518
        %677 = vmatpush1.xpose.msra.mxu0 %v517
        %678 = vmatprep.subr.mxu0 %v502
        %679 = vmatpush1.xpose.msra.mxu0 %v501
        %680 = vmatprep.subr.mxu0 %v486
        %681 = vmatpush1.xpose.msra.mxu0 %v485
        %682 = vmatprep.subr.mxu0 %v470
        %683 = vmatpush1.xpose.msra.mxu0 %v469
        %684 = vmatprep.subr.mxu0 %v454
        %685 = vmatpush1.xpose.msra.mxu0 %v453
        %686 = vmatprep.subr.mxu0 %v438
        %687 = vmatpush1.xpose.msra.mxu0 %v437
        %688 = vmatprep.subr.mxu0 %v422
        %689 = vmatpush1.xpose.msra.mxu0 %v421
        %690 = vmatprep.subr.mxu0 %v406
        %691 = vmatpush1.xpose.msra.mxu0 %v405
        %692 = vmatprep.subr.mxu0 %v390
        %693 = vmatpush1.xpose.msra.mxu0 %v389
        %694 = vmatprep.subr.mxu0 %v374
        %695 = vmatpush1.xpose.msra.mxu0 %v373
        %696 = vmatprep.subr.mxu0 %v358
        %697 = vmatpush1.xpose.msra.mxu0 %v357
        %698 = vmatprep.subr.mxu0 %v342
        %699 = vmatpush1.xpose.msra.mxu0 %v341
        %700 = vmatprep.subr.mxu0 %v326
        %701 = vmatpush1.xpose.msra.mxu0 %v325
        %702 = vmatprep.subr.mxu0 %v310
        %703 = vmatpush1.xpose.msra.mxu0 %v309
        %704 = vmatprep.subr.mxu0 %v294
        %705 = vmatpush1.xpose.msra.mxu0 %v293
        %706 = vmatprep.subr.mxu0 %v278
        %707 = vmatpush1.xpose.msra.mxu0 %v277
        %708 = vmatprep.subr.mxu0 0.0
        %709 = vmatpush2.xpose.msra.mxu0 0.0
        %710 = vmatprep.subr.mxu0 0.0
        %711 = vmatpush2.xpose.msra.mxu0 0.0
        %712 = vmatprep.subr.mxu0 0.0
        %713 = vmatpush2.xpose.msra.mxu0 0.0
        %714 = vmatprep.subr.mxu0 0.0
        %715 = vmatpush2.xpose.msra.mxu0 0.0
        %716 = vmatprep.subr.mxu0 0.0
        %717 = vmatpush2.xpose.msra.mxu0 0.0
        %718 = vmatprep.subr.mxu0 0.0
        %719 = vmatpush2.xpose.msra.mxu0 0.0
        %720 = vmatprep.subr.mxu0 0.0
        %721 = vmatpush2.xpose.msra.mxu0 0.0
        %722 = vmatprep.subr.mxu0 0.0
        %723 = vmatpush2.xpose.msra.mxu0 0.0
        %724 = vmatprep.subr.mxu0 0.0
        %725 = vmatpush2.xpose.msra.mxu0 0.0
        %726 = vmatprep.subr.mxu0 0.0
        %727 = vmatpush2.xpose.msra.mxu0 0.0
        %728 = vmatprep.subr.mxu0 0.0
        %729 = vmatpush2.xpose.msra.mxu0 0.0
        %730 = vmatprep.subr.mxu0 0.0
        %731 = vmatpush2.xpose.msra.mxu0 0.0
        %732 = vmatprep.subr.mxu0 0.0
        %733 = vmatpush2.xpose.msra.mxu0 0.0
        %734 = vmatprep.subr.mxu0 0.0
        %735 = vmatpush2.xpose.msra.mxu0 0.0
        %736 = vmatprep.subr.mxu0 0.0
        %737 = vmatpush2.xpose.msra.mxu0 0.0
        %738 = vmatprep.subr.mxu0 0.0
        %739 = vmatpush2.xpose.msra.mxu0 0.0
        %740 = vmatprep.mubr.f32.mxu0 %v262
        %741 = vmatmul.mubr.f32.gmra.mxu0 %v261
        %v742 = vpop.f32.mrf.mxu0
        %v743 = vadd.f32 %v673, %v742
        %v744 = vpop.f32.mrf.mxu0
        %745 = vdwg.mxu0
        %746 = vmatprep.subr.mxu0 %v520
        %747 = vmatpush1.xpose.msra.mxu0 %v519
        %748 = vmatprep.subr.mxu0 %v504
        %749 = vmatpush1.xpose.msra.mxu0 %v503
        %750 = vmatprep.subr.mxu0 %v488
        %751 = vmatpush1.xpose.msra.mxu0 %v487
        %752 = vmatprep.subr.mxu0 %v472
        %753 = vmatpush1.xpose.msra.mxu0 %v471
        %754 = vmatprep.subr.mxu0 %v456
        %755 = vmatpush1.xpose.msra.mxu0 %v455
        %756 = vmatprep.subr.mxu0 %v440
        %757 = vmatpush1.xpose.msra.mxu0 %v439
        %758 = vmatprep.subr.mxu0 %v424
        %759 = vmatpush1.xpose.msra.mxu0 %v423
        %760 = vmatprep.subr.mxu0 %v408
        %761 = vmatpush1.xpose.msra.mxu0 %v407
        %762 = vmatprep.subr.mxu0 %v392
        %763 = vmatpush1.xpose.msra.mxu0 %v391
        %764 = vmatprep.subr.mxu0 %v376
        %765 = vmatpush1.xpose.msra.mxu0 %v375
        %766 = vmatprep.subr.mxu0 %v360
        %767 = vmatpush1.xpose.msra.mxu0 %v359
        %768 = vmatprep.subr.mxu0 %v344
        %769 = vmatpush1.xpose.msra.mxu0 %v343
        %770 = vmatprep.subr.mxu0 %v328
        %771 = vmatpush1.xpose.msra.mxu0 %v327
        %772 = vmatprep.subr.mxu0 %v312
        %773 = vmatpush1.xpose.msra.mxu0 %v311
        %774 = vmatprep.subr.mxu0 %v296
        %775 = vmatpush1.xpose.msra.mxu0 %v295
        %776 = vmatprep.subr.mxu0 %v280
        %777 = vmatpush1.xpose.msra.mxu0 %v279
        %778 = vmatprep.subr.mxu0 0.0
        %779 = vmatpush2.xpose.msra.mxu0 0.0
        %780 = vmatprep.subr.mxu0 0.0
        %781 = vmatpush2.xpose.msra.mxu0 0.0
        %782 = vmatprep.subr.mxu0 0.0
        %783 = vmatpush2.xpose.msra.mxu0 0.0
        %784 = vmatprep.subr.mxu0 0.0
        %785 = vmatpush2.xpose.msra.mxu0 0.0
        %786 = vmatprep.subr.mxu0 0.0
        %787 = vmatpush2.xpose.msra.mxu0 0.0
        %788 = vmatprep.subr.mxu0 0.0
        %789 = vmatpush2.xpose.msra.mxu0 0.0
        %790 = vmatprep.subr.mxu0 0.0
        %791 = vmatpush2.xpose.msra.mxu0 0.0
        %792 = vmatprep.subr.mxu0 0.0
        %793 = vmatpush2.xpose.msra.mxu0 0.0
        %794 = vmatprep.subr.mxu0 0.0
        %795 = vmatpush2.xpose.msra.mxu0 0.0
        %796 = vmatprep.subr.mxu0 0.0
        %797 = vmatpush2.xpose.msra.mxu0 0.0
        %798 = vmatprep.subr.mxu0 0.0
        %799 = vmatpush2.xpose.msra.mxu0 0.0
        %800 = vmatprep.subr.mxu0 0.0
        %801 = vmatpush2.xpose.msra.mxu0 0.0
        %802 = vmatprep.subr.mxu0 0.0
        %803 = vmatpush2.xpose.msra.mxu0 0.0
        %804 = vmatprep.subr.mxu0 0.0
        %805 = vmatpush2.xpose.msra.mxu0 0.0
        %806 = vmatprep.subr.mxu0 0.0
        %807 = vmatpush2.xpose.msra.mxu0 0.0
        %808 = vmatprep.subr.mxu0 0.0
        %809 = vmatpush2.xpose.msra.mxu0 0.0
        %810 = vmatprep.mubr.f32.mxu0 %v264
        %811 = vmatmul.mubr.f32.gmra.mxu0 %v263
        %v812 = vpop.f32.mrf.mxu0
        %v813 = vadd.f32 %v743, %v812
        %v814 = vpop.f32.mrf.mxu0
        %815 = vdwg.mxu0
        %816 = vmatprep.subr.mxu0 %v522
        %817 = vmatpush1.xpose.msra.mxu0 %v521
        %818 = vmatprep.subr.mxu0 %v506
        %819 = vmatpush1.xpose.msra.mxu0 %v505
        %820 = vmatprep.subr.mxu0 %v490
        %821 = vmatpush1.xpose.msra.mxu0 %v489
        %822 = vmatprep.subr.mxu0 %v474
        %823 = vmatpush1.xpose.msra.mxu0 %v473
        %824 = vmatprep.subr.mxu0 %v458
        %825 = vmatpush1.xpose.msra.mxu0 %v457
        %826 = vmatprep.subr.mxu0 %v442
        %827 = vmatpush1.xpose.msra.mxu0 %v441
        %828 = vmatprep.subr.mxu0 %v426
        %829 = vmatpush1.xpose.msra.mxu0 %v425
        %830 = vmatprep.subr.mxu0 %v410
        %831 = vmatpush1.xpose.msra.mxu0 %v409
        %832 = vmatprep.subr.mxu0 %v394
        %833 = vmatpush1.xpose.msra.mxu0 %v393
        %834 = vmatprep.subr.mxu0 %v378
        %835 = vmatpush1.xpose.msra.mxu0 %v377
        %836 = vmatprep.subr.mxu0 %v362
        %837 = vmatpush1.xpose.msra.mxu0 %v361
        %838 = vmatprep.subr.mxu0 %v346
        %839 = vmatpush1.xpose.msra.mxu0 %v345
        %840 = vmatprep.subr.mxu0 %v330
        %841 = vmatpush1.xpose.msra.mxu0 %v329
        %842 = vmatprep.subr.mxu0 %v314
        %843 = vmatpush1.xpose.msra.mxu0 %v313
        %844 = vmatprep.subr.mxu0 %v298
        %845 = vmatpush1.xpose.msra.mxu0 %v297
        %846 = vmatprep.subr.mxu0 %v282
        %847 = vmatpush1.xpose.msra.mxu0 %v281
        %848 = vmatprep.subr.mxu0 0.0
        %849 = vmatpush2.xpose.msra.mxu0 0.0
        %850 = vmatprep.subr.mxu0 0.0
        %851 = vmatpush2.xpose.msra.mxu0 0.0
        %852 = vmatprep.subr.mxu0 0.0
        %853 = vmatpush2.xpose.msra.mxu0 0.0
        %854 = vmatprep.subr.mxu0 0.0
        %855 = vmatpush2.xpose.msra.mxu0 0.0
        %856 = vmatprep.subr.mxu0 0.0
        %857 = vmatpush2.xpose.msra.mxu0 0.0
        %858 = vmatprep.subr.mxu0 0.0
        %859 = vmatpush2.xpose.msra.mxu0 0.0
        %860 = vmatprep.subr.mxu0 0.0
        %861 = vmatpush2.xpose.msra.mxu0 0.0
        %862 = vmatprep.subr.mxu0 0.0
        %863 = vmatpush2.xpose.msra.mxu0 0.0
        %864 = vmatprep.subr.mxu0 0.0
        %865 = vmatpush2.xpose.msra.mxu0 0.0
        %866 = vmatprep.subr.mxu0 0.0
        %867 = vmatpush2.xpose.msra.mxu0 0.0
        %868 = vmatprep.subr.mxu0 0.0
        %869 = vmatpush2.xpose.msra.mxu0 0.0
        %870 = vmatprep.subr.mxu0 0.0
        %871 = vmatpush2.xpose.msra.mxu0 0.0
        %872 = vmatprep.subr.mxu0 0.0
        %873 = vmatpush2.xpose.msra.mxu0 0.0
        %874 = vmatprep.subr.mxu0 0.0
        %875 = vmatpush2.xpose.msra.mxu0 0.0
        %876 = vmatprep.subr.mxu0 0.0
        %877 = vmatpush2.xpose.msra.mxu0 0.0
        %878 = vmatprep.subr.mxu0 0.0
        %879 = vmatpush2.xpose.msra.mxu0 0.0
        %880 = vmatprep.mubr.f32.mxu0 %v266
        %881 = vmatmul.mubr.f32.gmra.mxu0 %v265
        %v882 = vpop.f32.mrf.mxu0
        %v883 = vadd.f32 %v813, %v882
        %v884 = vpop.f32.mrf.mxu0
        %885 = vdwg.mxu0
        %886 = vmatprep.subr.mxu0 %v524
        %887 = vmatpush1.xpose.msra.mxu0 %v523
        %888 = vmatprep.subr.mxu0 %v508
        %889 = vmatpush1.xpose.msra.mxu0 %v507
        %890 = vmatprep.subr.mxu0 %v492
        %891 = vmatpush1.xpose.msra.mxu0 %v491
        %892 = vmatprep.subr.mxu0 %v476
        %893 = vmatpush1.xpose.msra.mxu0 %v475
        %894 = vmatprep.subr.mxu0 %v460
        %895 = vmatpush1.xpose.msra.mxu0 %v459
        %896 = vmatprep.subr.mxu0 %v444
        %897 = vmatpush1.xpose.msra.mxu0 %v443
        %898 = vmatprep.subr.mxu0 %v428
        %899 = vmatpush1.xpose.msra.mxu0 %v427
        %900 = vmatprep.subr.mxu0 %v412
        %901 = vmatpush1.xpose.msra.mxu0 %v411
        %902 = vmatprep.subr.mxu0 %v396
        %903 = vmatpush1.xpose.msra.mxu0 %v395
        %904 = vmatprep.subr.mxu0 %v380
        %905 = vmatpush1.xpose.msra.mxu0 %v379
        %906 = vmatprep.subr.mxu0 %v364
        %907 = vmatpush1.xpose.msra.mxu0 %v363
        %908 = vmatprep.subr.mxu0 %v348
        %909 = vmatpush1.xpose.msra.mxu0 %v347
        %910 = vmatprep.subr.mxu0 %v332
        %911 = vmatpush1.xpose.msra.mxu0 %v331
        %912 = vmatprep.subr.mxu0 %v316
        %913 = vmatpush1.xpose.msra.mxu0 %v315
        %914 = vmatprep.subr.mxu0 %v300
        %915 = vmatpush1.xpose.msra.mxu0 %v299
        %916 = vmatprep.subr.mxu0 %v284
        %917 = vmatpush1.xpose.msra.mxu0 %v283
        %918 = vmatprep.subr.mxu0 0.0
        %919 = vmatpush2.xpose.msra.mxu0 0.0
        %920 = vmatprep.subr.mxu0 0.0
        %921 = vmatpush2.xpose.msra.mxu0 0.0
        %922 = vmatprep.subr.mxu0 0.0
        %923 = vmatpush2.xpose.msra.mxu0 0.0
        %924 = vmatprep.subr.mxu0 0.0
        %925 = vmatpush2.xpose.msra.mxu0 0.0
        %926 = vmatprep.subr.mxu0 0.0
        %927 = vmatpush2.xpose.msra.mxu0 0.0
        %928 = vmatprep.subr.mxu0 0.0
        %929 = vmatpush2.xpose.msra.mxu0 0.0
        %930 = vmatprep.subr.mxu0 0.0
        %931 = vmatpush2.xpose.msra.mxu0 0.0
        %932 = vmatprep.subr.mxu0 0.0
        %933 = vmatpush2.xpose.msra.mxu0 0.0
        %934 = vmatprep.subr.mxu0 0.0
        %935 = vmatpush2.xpose.msra.mxu0 0.0
        %936 = vmatprep.subr.mxu0 0.0
        %937 = vmatpush2.xpose.msra.mxu0 0.0
        %938 = vmatprep.subr.mxu0 0.0
        %939 = vmatpush2.xpose.msra.mxu0 0.0
        %940 = vmatprep.subr.mxu0 0.0
        %941 = vmatpush2.xpose.msra.mxu0 0.0
        %942 = vmatprep.subr.mxu0 0.0
        %943 = vmatpush2.xpose.msra.mxu0 0.0
        %944 = vmatprep.subr.mxu0 0.0
        %945 = vmatpush2.xpose.msra.mxu0 0.0
        %946 = vmatprep.subr.mxu0 0.0
        %947 = vmatpush2.xpose.msra.mxu0 0.0
        %948 = vmatprep.subr.mxu0 0.0
        %949 = vmatpush2.xpose.msra.mxu0 0.0
        %950 = vmatprep.mubr.f32.mxu0 %v268
        %951 = vmatmul.mubr.f32.gmra.mxu0 %v267
        %v952 = vpop.f32.mrf.mxu0
        %v953 = vadd.f32 %v883, %v952
        %v954 = vpop.f32.mrf.mxu0
        %955 = vdwg.mxu0
        %956 = vmatprep.subr.mxu0 %v526
        %957 = vmatpush1.xpose.msra.mxu0 %v525
        %958 = vmatprep.subr.mxu0 %v510
        %959 = vmatpush1.xpose.msra.mxu0 %v509
        %960 = vmatprep.subr.mxu0 %v494
        %961 = vmatpush1.xpose.msra.mxu0 %v493
        %962 = vmatprep.subr.mxu0 %v478
        %963 = vmatpush1.xpose.msra.mxu0 %v477
        %964 = vmatprep.subr.mxu0 %v462
        %965 = vmatpush1.xpose.msra.mxu0 %v461
        %966 = vmatprep.subr.mxu0 %v446
        %967 = vmatpush1.xpose.msra.mxu0 %v445
        %968 = vmatprep.subr.mxu0 %v430
        %969 = vmatpush1.xpose.msra.mxu0 %v429
        %970 = vmatprep.subr.mxu0 %v414
        %971 = vmatpush1.xpose.msra.mxu0 %v413
        %972 = vmatprep.subr.mxu0 %v398
        %973 = vmatpush1.xpose.msra.mxu0 %v397
        %974 = vmatprep.subr.mxu0 %v382
        %975 = vmatpush1.xpose.msra.mxu0 %v381
        %976 = vmatprep.subr.mxu0 %v366
        %977 = vmatpush1.xpose.msra.mxu0 %v365
        %978 = vmatprep.subr.mxu0 %v350
        %979 = vmatpush1.xpose.msra.mxu0 %v349
        %980 = vmatprep.subr.mxu0 %v334
        %981 = vmatpush1.xpose.msra.mxu0 %v333
        %982 = vmatprep.subr.mxu0 %v318
        %983 = vmatpush1.xpose.msra.mxu0 %v317
        %984 = vmatprep.subr.mxu0 %v302
        %985 = vmatpush1.xpose.msra.mxu0 %v301
        %986 = vmatprep.subr.mxu0 %v286
        %987 = vmatpush1.xpose.msra.mxu0 %v285
        %988 = vmatprep.subr.mxu0 0.0
        %989 = vmatpush2.xpose.msra.mxu0 0.0
        %990 = vmatprep.subr.mxu0 0.0
        %991 = vmatpush2.xpose.msra.mxu0 0.0
        %992 = vmatprep.subr.mxu0 0.0
        %993 = vmatpush2.xpose.msra.mxu0 0.0
        %994 = vmatprep.subr.mxu0 0.0
        %995 = vmatpush2.xpose.msra.mxu0 0.0
        %996 = vmatprep.subr.mxu0 0.0
        %997 = vmatpush2.xpose.msra.mxu0 0.0
        %998 = vmatprep.subr.mxu0 0.0
        %999 = vmatpush2.xpose.msra.mxu0 0.0
        %1000 = vmatprep.subr.mxu0 0.0
        %1001 = vmatpush2.xpose.msra.mxu0 0.0
        %1002 = vmatprep.subr.mxu0 0.0
        %1003 = vmatpush2.xpose.msra.mxu0 0.0
        %1004 = vmatprep.subr.mxu0 0.0
        %1005 = vmatpush2.xpose.msra.mxu0 0.0
        %1006 = vmatprep.subr.mxu0 0.0
        %1007 = vmatpush2.xpose.msra.mxu0 0.0
        %1008 = vmatprep.subr.mxu0 0.0
        %1009 = vmatpush2.xpose.msra.mxu0 0.0
        %1010 = vmatprep.subr.mxu0 0.0
        %1011 = vmatpush2.xpose.msra.mxu0 0.0
        %1012 = vmatprep.subr.mxu0 0.0
        %1013 = vmatpush2.xpose.msra.mxu0 0.0
        %1014 = vmatprep.subr.mxu0 0.0
        %1015 = vmatpush2.xpose.msra.mxu0 0.0
        %1016 = vmatprep.subr.mxu0 0.0
        %1017 = vmatpush2.xpose.msra.mxu0 0.0
        %1018 = vmatprep.subr.mxu0 0.0
        %1019 = vmatpush2.xpose.msra.mxu0 0.0
        %1020 = vmatprep.mubr.f32.mxu0 %v270
        %1021 = vmatmul.mubr.f32.gmra.mxu0 %v269
        %v1022 = vpop.f32.mrf.mxu0
        %v1023 = vadd.f32 %v953, %v1022
        %v1024 = vpop.f32.mrf.mxu0
        %1025 = vdwg.mxu0
        %1026 = vmatprep.subr.mxu0 %v528
        %1027 = vmatpush1.xpose.msra.mxu0 %v527
        %1028 = vmatprep.subr.mxu0 %v512
        %1029 = vmatpush1.xpose.msra.mxu0 %v511
        %1030 = vmatprep.subr.mxu0 %v496
        %1031 = vmatpush1.xpose.msra.mxu0 %v495
        %1032 = vmatprep.subr.mxu0 %v480
        %1033 = vmatpush1.xpose.msra.mxu0 %v479
        %1034 = vmatprep.subr.mxu0 %v464
        %1035 = vmatpush1.xpose.msra.mxu0 %v463
        %1036 = vmatprep.subr.mxu0 %v448
        %1037 = vmatpush1.xpose.msra.mxu0 %v447
        %1038 = vmatprep.subr.mxu0 %v432
        %1039 = vmatpush1.xpose.msra.mxu0 %v431
        %1040 = vmatprep.subr.mxu0 %v416
        %1041 = vmatpush1.xpose.msra.mxu0 %v415
        %1042 = vmatprep.subr.mxu0 %v400
        %1043 = vmatpush1.xpose.msra.mxu0 %v399
        %1044 = vmatprep.subr.mxu0 %v384
        %1045 = vmatpush1.xpose.msra.mxu0 %v383
        %1046 = vmatprep.subr.mxu0 %v368
        %1047 = vmatpush1.xpose.msra.mxu0 %v367
        %1048 = vmatprep.subr.mxu0 %v352
        %1049 = vmatpush1.xpose.msra.mxu0 %v351
        %1050 = vmatprep.subr.mxu0 %v336
        %1051 = vmatpush1.xpose.msra.mxu0 %v335
        %1052 = vmatprep.subr.mxu0 %v320
        %1053 = vmatpush1.xpose.msra.mxu0 %v319
        %1054 = vmatprep.subr.mxu0 %v304
        %1055 = vmatpush1.xpose.msra.mxu0 %v303
        %1056 = vmatprep.subr.mxu0 %v288
        %1057 = vmatpush1.xpose.msra.mxu0 %v287
        %1058 = vmatprep.subr.mxu0 0.0
        %1059 = vmatpush2.xpose.msra.mxu0 0.0
        %1060 = vmatprep.subr.mxu0 0.0
        %1061 = vmatpush2.xpose.msra.mxu0 0.0
        %1062 = vmatprep.subr.mxu0 0.0
        %1063 = vmatpush2.xpose.msra.mxu0 0.0
        %1064 = vmatprep.subr.mxu0 0.0
        %1065 = vmatpush2.xpose.msra.mxu0 0.0
        %1066 = vmatprep.subr.mxu0 0.0
        %1067 = vmatpush2.xpose.msra.mxu0 0.0
        %1068 = vmatprep.subr.mxu0 0.0
        %1069 = vmatpush2.xpose.msra.mxu0 0.0
        %1070 = vmatprep.subr.mxu0 0.0
        %1071 = vmatpush2.xpose.msra.mxu0 0.0
        %1072 = vmatprep.subr.mxu0 0.0
        %1073 = vmatpush2.xpose.msra.mxu0 0.0
        %1074 = vmatprep.subr.mxu0 0.0
        %1075 = vmatpush2.xpose.msra.mxu0 0.0
        %1076 = vmatprep.subr.mxu0 0.0
        %1077 = vmatpush2.xpose.msra.mxu0 0.0
        %1078 = vmatprep.subr.mxu0 0.0
        %1079 = vmatpush2.xpose.msra.mxu0 0.0
        %1080 = vmatprep.subr.mxu0 0.0
        %1081 = vmatpush2.xpose.msra.mxu0 0.0
        %1082 = vmatprep.subr.mxu0 0.0
        %1083 = vmatpush2.xpose.msra.mxu0 0.0
        %1084 = vmatprep.subr.mxu0 0.0
        %1085 = vmatpush2.xpose.msra.mxu0 0.0
        %1086 = vmatprep.subr.mxu0 0.0
        %1087 = vmatpush2.xpose.msra.mxu0 0.0
        %1088 = vmatprep.subr.mxu0 0.0
        %1089 = vmatpush2.xpose.msra.mxu0 0.0
        %1090 = vmatprep.mubr.f32.mxu0 %v272
        %1091 = vmatmul.mubr.f32.gmra.mxu0 %v271
        %v1092 = vpop.f32.mrf.mxu0
        %v1093 = vadd.f32 %v1023, %v1092
        %v1094 = vpop.f32.mrf.mxu0
        %1095 = vdwg.mxu0
        %v1096 = vsub.f32 0.0, %v1093
        %v1097 = vmul.f32 %v1096, 1.442695
        %v1098 = vpow.pop %v1097
        %v1099 = vadd.f32 %v1098, 1.0
        %v1100 = vrcp.pop %v1099
        %1101 = vst [vmem:[%s255] sm:$0xff] %v1100
        %s1102 = sand.u32 %s121, 1
        %s1103 = scalar_lea.sflag [#allocation4], %s1102
        %s1104 = sand.u32 %s121, 1
        %s1105 = smul.addr %s1104, 8
        %s1106 = scalar_lea.vmem [#allocation8], %s1105
        // Predicated region
        $region45: #{tpu_custom_call.1} parent=31 // pred_check
          %p1107 = pneg %p131
        $region46: #{tpu_custom_call.1} parent=31 // pred_check_branch
          %1109 = sbr.rel (%p1107) target = $region48
        $region47: #{tpu_custom_call.1} parent=31 // pred_region
          %s1111 = ssub.s32 128, 128
          %1112 = vsyncadd %s1103, %s1111
          %s1113 = smul.addr %s25, 2
          %s1114 = sadd.s32 %s26, %s1113
          %s1115 = smul.addr %s1114, 128
          %s1116 = scalar_lea.hbm %s3, %s1115
          %s1118 = sshll.u32 %s1106, 4
          %s1119 = int_to_ptr.vmem [resolvable:$true] %s1118
          %1121 = dma.vmem_to_hbm [thread:$0]  %s1119, 128, %s1116, %s1103
        $region48: #{tpu_custom_call.1} parent=31 // pred_fallthru
          _
      $region32: #{tpu_custom_call.1} parent=5 // pred_fallthru
        _
      %p1122 = scmp.le.s32.totalorder 2, %s16
      // Predicated region
      $region49: #{tpu_custom_call.1} parent=5 // pred_check
        %p1123 = pneg %p1122
      $region50: #{tpu_custom_call.1} parent=5 // pred_check_branch
        %1125 = sbr.rel (%p1123) target = $region52
      $region51: #{tpu_custom_call.1} parent=5 // pred_region
        %s1126 = ssub.s32 %s16, 2
        // Predicated region
        $region53: #{tpu_custom_call.1} parent=51 // pred_check
          %p1127 = pneg %p137
        $region54: #{tpu_custom_call.1} parent=51 // pred_check_branch
          %1129 = sbr.rel (%p1127) target = $region56
        $region55: #{tpu_custom_call.1} parent=51 // pred_region
          %s1130 = sand.u32 %s122, 1
          %s1131 = scalar_lea.sflag [#allocation4], %s1130
          %s1132 = sand.u32 %s122, 1
          %s1133 = smul.addr %s1132, 8
          %s1134 = scalar_lea.vmem [#allocation8], %s1133
          %1135 = dma.done %s1131, 128
        $region56: #{tpu_custom_call.1} parent=51 // pred_fallthru
          _
      $region52: #{tpu_custom_call.1} parent=5 // pred_fallthru
        _
    $region6: #{tpu_custom_call.1} parent=1 // loop_footer
      %s20 = sadd.s32 1, %s16
    $region7: #{tpu_custom_call.1} parent=1 // loop_footer_branch
      %15 = sbr.rel target = $region3
    $region8: #{tpu_custom_call.1} parent=1 // loop_exit
      _
    %1136 = vsyncpa [#allocation3], 1
    %s1137 = scalar_lea.sflag [#allocation3], 1
    %1138 = vsyncpa %s1137, 1
    %1139 = vsyncpa [#allocation6], 1
    %s1140 = scalar_lea.sflag [#allocation6], 1
    %1141 = vsyncpa %s1140, 1
    %1142 = vsyncpa [#allocation4], 1
    %s1143 = scalar_lea.sflag [#allocation4], 1
    %1144 = vsyncpa %s1143, 1

</llo_original>
